<compile_context>
chip_gen: v5e
topology: v5e:2x2
jax: 0.10.0
libtpu: 0.0.40
codegen_flags: <defaults>
</compile_context>

<pallas_src>
import jax
import jax.numpy as jnp
from jax.experimental import pallas as pl
from jax.experimental.pallas import tpu as pltpu


def _round_up(x, m):
    return ((x + m - 1) // m) * m


def _fused_linear_kernel(x_ref, w_ref, b_ref, o_ref):
    # x_ref: (TM, F_pad), w_ref: (F_pad, H_pad), b_ref: (1, H_pad), o_ref: (TM, H_pad)
    acc = jnp.dot(x_ref[...], w_ref[...], preferred_element_type=jnp.float32)
    o_ref[...] = (acc + b_ref[...]).astype(o_ref.dtype)


def fused_embedding_linears(x_stacked, w_stacked, b_stacked, *, tm):
    """One launch computing y[s] = x[s] @ w[s] + b[s] for s in {ligand, pocket}.

    x_stacked: (2, N_pad, F_pad) float32
    w_stacked: (2, F_pad, H_pad) float32  (already transposed to (in, out) + padded)
    b_stacked: (2, 1, H_pad)     float32
    returns    (2, N_pad, H_pad) float32
    """
    n_seg, n_pad, f_pad = x_stacked.shape
    h_pad = w_stacked.shape[-1]
    n_tiles = n_pad // tm

    flops = 2 * n_seg * n_pad * f_pad * h_pad
    bytes_accessed = 4 * (x_stacked.size + w_stacked.size + b_stacked.size
                          + n_seg * n_pad * h_pad)

    return pl.pallas_call(
        _fused_linear_kernel,
        out_shape=jax.ShapeDtypeStruct((n_seg, n_pad, h_pad), x_stacked.dtype),
        grid_spec=pltpu.PrefetchScalarGridSpec(
            num_scalar_prefetch=0,
            grid=(n_seg, n_tiles),
            in_specs=[
                # x: row-tiled, segment-selected; leading dim squeezed (None).
                pl.BlockSpec((None, tm, f_pad), lambda s, i: (s, i, 0)),
                # weights / bias: resident per segment across all row tiles.
                pl.BlockSpec((None, f_pad, h_pad), lambda s, i: (s, 0, 0)),
                pl.BlockSpec((None, 1, h_pad), lambda s, i: (s, 0, 0)),
            ],
            out_specs=pl.BlockSpec((None, tm, h_pad), lambda s, i: (s, i, 0)),
        ),
        compiler_params=pltpu.CompilerParams(
            # Both axes fully independent -> megacore sharding on v7x, free elsewhere.
            dimension_semantics=("parallel", "parallel"),
        ),
        cost_estimate=pl.CostEstimate(
            flops=flops, bytes_accessed=bytes_accessed, transcendentals=0),
    )(x_stacked, w_stacked, b_stacked)


class EmbeddingPallas:
    """JAX/Pallas equivalent of the PyTorch `Embedding` module (node-emb part)."""

    # Largest row tile (multiple of 8). Per-step VMEM footprint with F_pad=H_pad=128:
    # 2*(TM*128 + TM*128)*4B + 128*128*4B  ->  ~1 MiB at TM=512, safe on v5e/v6e/v7x.
    TM_MAX = 512

    def __init__(self, num_ligand_atom_feature, num_pocket_atom_feature,
                 num_hidden_feature, key):
        k1, k2, k3, k4 = jax.random.split(key, 4)
        # Deterministic init mimicking nn.Linear's uniform(-1/sqrt(fan_in), 1/sqrt(fan_in))
        lim_l = 1.0 / jnp.sqrt(jnp.float32(num_ligand_atom_feature))
        lim_p = 1.0 / jnp.sqrt(jnp.float32(num_pocket_atom_feature))
        self.l_w = jax.random.uniform(k1, (num_hidden_feature, num_ligand_atom_feature),
                                      jnp.float32, -lim_l, lim_l)
        self.l_b = jax.random.uniform(k2, (num_hidden_feature,), jnp.float32, -lim_l, lim_l)
        self.p_w = jax.random.uniform(k3, (num_hidden_feature, num_pocket_atom_feature),
                                      jnp.float32, -lim_p, lim_p)
        self.p_b = jax.random.uniform(k4, (num_hidden_feature,), jnp.float32, -lim_p, lim_p)

        self.num_hidden_feature = num_hidden_feature
        self.f_l = num_ligand_atom_feature
        self.f_p = num_pocket_atom_feature

        # ---- One-time weight prep (transpose + lane-pad + stack), hoisted out of
        # the forward pass so no per-call transpose / extra HBM traffic. ----
        self.f_pad = _round_up(max(self.f_l, self.f_p), 128)
        self.h_pad = _round_up(num_hidden_feature, 128)

        w_stacked = jnp.zeros((2, self.f_pad, self.h_pad), jnp.float32)
        w_stacked = w_stacked.at[0, :self.f_l, :num_hidden_feature].set(self.l_w.T)
        w_stacked = w_stacked.at[1, :self.f_p, :num_hidden_feature].set(self.p_w.T)
        self.w_stacked = w_stacked

        b_stacked = jnp.zeros((2, 1, self.h_pad), jnp.float32)
        b_stacked = b_stacked.at[0, 0, :num_hidden_feature].set(self.l_b)
        b_stacked = b_stacked.at[1, 0, :num_hidden_feature].set(self.p_b)
        self.b_stacked = b_stacked

    def __call__(self, data, cond=None):
        # data: {'ligand': {'x': (N_l, F_l)}, 'pocket': {'x': (N_p, F_p)}}
        x_l = data['ligand']['x']
        x_p = data['pocket']['x']
        n_l, n_p = x_l.shape[0], x_p.shape[0]
        h = self.num_hidden_feature

        # Row tile: largest multiple of 8 up to TM_MAX; pad rows so tiles divide evenly.
        n_max = max(n_l, n_p)
        tm = min(self.TM_MAX, _round_up(n_max, 8))
        n_pad = _round_up(n_max, tm)

        # Zero-pad both node-feature matrices to a common (N_pad, F_pad) slab and
        # stack along a segment axis so both linears run in a single launch.
        x_stacked = jnp.zeros((2, n_pad, self.f_pad), jnp.float32)
        x_stacked = x_stacked.at[0, :n_l, :self.f_l].set(x_l)
        x_stacked = x_stacked.at[1, :n_p, :self.f_p].set(x_p)

        out = fused_embedding_linears(x_stacked, self.w_stacked, self.b_stacked, tm=tm)

        data['ligand']['h'] = out[0, :n_l, :h]
        data['pocket']['h'] = out[1, :n_p, :h]
        # TODO(synk): E3II_Layer propagation layers omitted (definition not provided).
        return data


if __name__ == "__main__":
    key = jax.random.PRNGKey(0)
    k_mod, k_lx, k_px = jax.random.split(key, 3)

    num_ligand_atom_feature = 16
    num_pocket_atom_feature = 24
    num_hidden_feature = 32
    n_ligand_atoms = 8
    n_pocket_atoms = 12

    model = EmbeddingPallas(num_ligand_atom_feature, num_pocket_atom_feature,
                            num_hidden_feature, k_mod)

    data = {
        'ligand': {'x': jax.random.normal(k_lx, (n_ligand_atoms, num_ligand_atom_feature),
                                          jnp.float32)},
        'pocket': {'x': jax.random.normal(k_px, (n_pocket_atoms, num_pocket_atom_feature),
                                          jnp.float32)},
    }

    out = model(data)
    lig_h = jax.block_until_ready(out['ligand']['h'])
    poc_h = jax.block_until_ready(out['pocket']['h'])

    # Sanity check against plain-JAX reference (nn.Linear semantics).
    ref_l = data['ligand']['x'] @ model.l_w.T + model.l_b
    ref_p = data['pocket']['x'] @ model.p_w.T + model.p_b
    assert lig_h.shape == (n_ligand_atoms, num_hidden_feature)
    assert poc_h.shape == (n_pocket_atoms, num_hidden_feature)
    assert jnp.allclose(lig_h, ref_l, atol=1e-5, rtol=1e-5)
    assert jnp.allclose(poc_h, ref_p, atol=1e-5, rtol=1e-5)

    print("KERNEL_OK")
</pallas_src>

<mosaic_0001>
module attributes {stable_mosaic.version = 11 : i64} {
  func.func @_fused_linear_kernel(%arg0: i32, %arg1: i32, %arg2: memref<1x16x128xf32, #tpu.memory_space<vmem>>, %arg3: memref<1x128x128xf32, #tpu.memory_space<vmem>>, %arg4: memref<1x1x128xf32, #tpu.memory_space<vmem>>, %arg5: memref<1x16x128xf32, #tpu.memory_space<vmem>>) attributes {dimension_semantics = [#tpu.dimension_semantics<parallel>, #tpu.dimension_semantics<parallel>], iteration_bounds = array<i64: 2, 1>, scalar_prefetch = 0 : i64, scratch_operands = 0 : i64, tpu.core_type = #tpu.core_type<tc>, window_params = [{transform_indices = @transform_0, window_bounds = array<i64: 1, 16, 128>}, {transform_indices = @transform_1, window_bounds = array<i64: 1, 128, 128>}, {transform_indices = @transform_2, window_bounds = array<i64: 1, 1, 128>}, {transform_indices = @transform_3, window_bounds = array<i64: 1, 16, 128>}]} {
    %c0 = arith.constant 0 : index
    %c0_0 = arith.constant 0 : index
    %c0_1 = arith.constant 0 : index
    %0 = vector.load %arg2[%c0, %c0_0, %c0_1] : memref<1x16x128xf32, #tpu.memory_space<vmem>>, vector<1x16x128xf32>
    %1 = vector.shape_cast %0 : vector<1x16x128xf32> to vector<16x128xf32>
    %c0_2 = arith.constant 0 : index
    %c0_3 = arith.constant 0 : index
    %c0_4 = arith.constant 0 : index
    %2 = vector.load %arg3[%c0_2, %c0_3, %c0_4] : memref<1x128x128xf32, #tpu.memory_space<vmem>>, vector<1x128x128xf32>
    %3 = vector.shape_cast %2 : vector<1x128x128xf32> to vector<128x128xf32>
    %cst = arith.constant dense<0.000000e+00> : vector<16x128xf32>
    %4 = tpu.matmul %1, %3, %cst {dimension_numbers = #tpu.dot_dimension_numbers<[1], [0], [0], [1], [0, 0, 1, 1], [], []>} : vector<16x128xf32>, vector<128x128xf32>, vector<16x128xf32> -> vector<16x128xf32>
    %c0_5 = arith.constant 0 : index
    %c0_6 = arith.constant 0 : index
    %c0_7 = arith.constant 0 : index
    %5 = vector.load %arg4[%c0_5, %c0_6, %c0_7] : memref<1x1x128xf32, #tpu.memory_space<vmem>>, vector<1x1x128xf32>
    %6 = vector.shape_cast %5 : vector<1x1x128xf32> to vector<1x128xf32>
    %7 = vector.broadcast %6 : vector<1x128xf32> to vector<16x128xf32>
    %8 = arith.addf %4, %7 : vector<16x128xf32>
    %c0_8 = arith.constant 0 : index
    %c0_9 = arith.constant 0 : index
    %c0_10 = arith.constant 0 : index
    %9 = vector.load %arg5[%c0_8, %c0_9, %c0_10] : memref<1x16x128xf32, #tpu.memory_space<vmem>>, vector<1x16x128xf32>
    %10 = vector.shape_cast %9 : vector<1x16x128xf32> to vector<16x128xf32>
    %11 = vector.shape_cast %8 : vector<16x128xf32> to vector<1x16x128xf32>
    tpu.vector_store %arg5[%c0_8, %c0_9, %c0_10], %11 {strides = array<i32>} : memref<1x16x128xf32, #tpu.memory_space<vmem>>, vector<1x16x128xf32>,
    return
  }
  func.func @transform_0(%arg0: i32, %arg1: i32) -> (i32, i32, i32) {
    %c0_i32 = arith.constant 0 : i32
    %c0_i32_0 = arith.constant 0 : i32
    return %arg0, %arg1, %c0_i32 : i32, i32, i32
  }
  func.func @transform_1(%arg0: i32, %arg1: i32) -> (i32, i32, i32) {
    %c0_i32 = arith.constant 0 : i32
    %c0_i32_0 = arith.constant 0 : i32
    %c0_i32_1 = arith.constant 0 : i32
    return %arg0, %c0_i32, %c0_i32_0 : i32, i32, i32
  }
  func.func @transform_2(%arg0: i32, %arg1: i32) -> (i32, i32, i32) {
    %c0_i32 = arith.constant 0 : i32
    %c0_i32_0 = arith.constant 0 : i32
    %c0_i32_1 = arith.constant 0 : i32
    return %arg0, %c0_i32, %c0_i32_0 : i32, i32, i32
  }
  func.func @transform_3(%arg0: i32, %arg1: i32) -> (i32, i32, i32) {
    %c0_i32 = arith.constant 0 : i32
    %c0_i32_0 = arith.constant 0 : i32
    return %arg0, %arg1, %c0_i32 : i32, i32, i32
  }
}

</mosaic_0001>

<llo_original>
// kernel: tpu_custom_call.1
$region0: #{tpu_custom_call.1}
  #allocation0 [shape = 'u32[]', space=smem, size = 0x4, offset = 0x4, fixed_abs, tag = 'smem constant byte address 0x4 - core index']
  #allocation1 [shape = 'u32[72,128]{1,0:T(1,128)}', space=vmem, size = 0x9000, scoped, tag = 'internal scratch']
  %s0 = inlined_call_operand.hbm [shape: f32[2,16,128], index: 0, kind: input, shape index: {}]
  %s1 = inlined_call_operand.hbm [shape: f32[2,128,128], index: 1, kind: input, shape index: {}]
  %s2 = inlined_call_operand.hbm [shape: f32[2,1,128], index: 2, kind: input, shape index: {}]
  %s3 = inlined_call_operand.hbm [shape: f32[2,16,128], index: 3, kind: output, shape index: {}]
  %s4 = sld [smem:[#allocation0]]
  $region57: #{tpu_custom_call.1} parent=0
    _
  %s6 = ssub.s32 1, %s4
  %s7 = scalar_select 0, %s6, %s4
  $region1: #{tpu_custom_call.1} parent=0
    #allocation2 [shape = 'u8[16384]{0}', space=vmem, size = 0x4000, scoped, tag = 'input window, operand 0']
    #allocation3 [shape = 's32[2]{0}', space=sflag, size = 0x8, scoped, tag = 'scoped memory for tpu_custom_call.1']
    #allocation4 [shape = 's32[2]{0}', space=sflag, size = 0x8, scoped, tag = 'scoped memory for tpu_custom_call.1']
    #allocation5 [shape = 'u8[131072]{0}', space=vmem, size = 0x20000, scoped, tag = 'input window, operand 1']
    #allocation6 [shape = 's32[2]{0}', space=sflag, size = 0x8, scoped, tag = 'scoped memory for tpu_custom_call.1']
    #allocation7 [shape = 'u8[1024]{0}', space=vmem, size = 0x400, scoped, tag = 'input window, operand 2']
    #allocation8 [shape = 'u8[16384]{0}', space=vmem, size = 0x4000, scoped, tag = 'output window, operand 0']
    %8 = vsyncpa [#allocation3], 0
    %s9 = scalar_lea.sflag [#allocation3], 1
    %10 = vsyncpa %s9, 0
    %11 = vsyncpa [#allocation6], 0
    %s12 = scalar_lea.sflag [#allocation6], 1
    %13 = vsyncpa %s12, 0
    %14 = vsyncpa [#allocation4], 0
    %s15 = scalar_lea.sflag [#allocation4], 1
    %16 = vsyncpa %s15, 0
    loop: start=0, step=1, limit=4
    $region2: #{tpu_custom_call.1} parent=1 // loop_pre_header
      _
    $region3: #{tpu_custom_call.1} parent=1 // loop_header
      %s18 = sphi 0, %s22
      %p19 = scmp.ge.s32.totalorder %s18, 4
      %s25 = sphi 0, %s37
      %s26 = sphi 0, %s33
      %s27 = sphi 0, %s25
      %s28 = sphi 0, %s26
      %s29 = sphi 0, %s27
      %s30 = sphi 0, %s28
      %s42 = sphi 0, %s44
      %s45 = sphi 0, %s42
      %s46 = sphi 0, %s45
      %s62 = sphi 0, %s46
      %s68 = sphi 0, %s70
      %s71 = sphi 0, %s68
      %s72 = sphi 0, %s71
      %s88 = sphi 0, %s72
      %s94 = sphi 0, %s96
      %s97 = sphi 0, %s94
      %s98 = sphi 0, %s97
      %s114 = sphi 0, %s98
      %s122 = sphi 0, %s124
      %s125 = sphi 0, %s122
      %s126 = sphi 0, %s125
      %s142 = sphi 0, %s126
    $region4: #{tpu_custom_call.1} parent=1 // loop_header_branch
      %21 = sbr.rel (%p19) target = $region8
    $region5: #{tpu_custom_call.1} parent=1 // loop_body
      %s23 = ssub.s32 %s18, 1
      %s24 = ssub.s32 %s18, 2
      %s31 = sadd.s32 1, %s26
      %p32 = scmp.ge.s32.totalorder %s31, 1
      %s33 = scalar_select %p32, 0, %s31
      %s34 = sadd.s32 1, %s25
      %s35 = scalar_select %p32, %s34, %s25
      %p36 = scmp.ge.s32.totalorder %s35, 2
      %s37 = scalar_select %p36, 0, %s35
      %s38 = ssub.s32 %s25, %s37
      %s39 = ssub.s32 %s26, %s33
      %s40 = sor.u32 %s38, %s39
      %p41 = scmp.eq.s32.totalorder %s40, 0
      %s43 = sadd.s32 %s42, 1
      %s44 = scalar_select %p41, %s42, %s43
      %p47 = pneg %p41
      %p48 = scmp.eq.s32.totalorder %s18, 1
      %p49 = por %p47, %p48
      %p50 = scmp.ne.s32.totalorder %s42, %s45
      %p51 = scmp.eq.s32.totalorder %s18, 0
      %p52 = por %p50, %p51
      %p53 = scmp.ne.s32.totalorder %s42, %s45
      %p54 = scmp.eq.s32.totalorder %s23, 1
      %p55 = por %p53, %p54
      %p56 = scmp.ne.s32.totalorder %s45, %s46
      %p57 = scmp.eq.s32.totalorder %s23, 0
      %p58 = por %p56, %p57
      %p59 = scmp.ne.s32.totalorder %s45, %s46
      %p60 = scmp.eq.s32.totalorder %s24, 1
      %p61 = por %p59, %p60
      %p63 = scmp.ne.s32.totalorder %s46, %s62
      %p64 = scmp.eq.s32.totalorder %s24, 0
      %p65 = por %p63, %p64
      %s66 = ssub.s32 %s25, %s37
      %p67 = scmp.eq.s32.totalorder %s66, 0
      %s69 = sadd.s32 %s68, 1
      %s70 = scalar_select %p67, %s68, %s69
      %p73 = pneg %p67
      %p74 = scmp.eq.s32.totalorder %s18, 1
      %p75 = por %p73, %p74
      %p76 = scmp.ne.s32.totalorder %s68, %s71
      %p77 = scmp.eq.s32.totalorder %s18, 0
      %p78 = por %p76, %p77
      %p79 = scmp.ne.s32.totalorder %s68, %s71
      %p80 = scmp.eq.s32.totalorder %s23, 1
      %p81 = por %p79, %p80
      %p82 = scmp.ne.s32.totalorder %s71, %s72
      %p83 = scmp.eq.s32.totalorder %s23, 0
      %p84 = por %p82, %p83
      %p85 = scmp.ne.s32.totalorder %s71, %s72
      %p86 = scmp.eq.s32.totalorder %s24, 1
      %p87 = por %p85, %p86
      %p89 = scmp.ne.s32.totalorder %s72, %s88
      %p90 = scmp.eq.s32.totalorder %s24, 0
      %p91 = por %p89, %p90
      %s92 = ssub.s32 %s25, %s37
      %p93 = scmp.eq.s32.totalorder %s92, 0
      %s95 = sadd.s32 %s94, 1
      %s96 = scalar_select %p93, %s94, %s95
      %p99 = pneg %p93
      %p100 = scmp.eq.s32.totalorder %s18, 1
      %p101 = por %p99, %p100
      %p102 = scmp.ne.s32.totalorder %s94, %s97
      %p103 = scmp.eq.s32.totalorder %s18, 0
      %p104 = por %p102, %p103
      %p105 = scmp.ne.s32.totalorder %s94, %s97
      %p106 = scmp.eq.s32.totalorder %s23, 1
      %p107 = por %p105, %p106
      %p108 = scmp.ne.s32.totalorder %s97, %s98
      %p109 = scmp.eq.s32.totalorder %s23, 0
      %p110 = por %p108, %p109
      %p111 = scmp.ne.s32.totalorder %s97, %s98
      %p112 = scmp.eq.s32.totalorder %s24, 1
      %p113 = por %p111, %p112
      %p115 = scmp.ne.s32.totalorder %s98, %s114
      %p116 = scmp.eq.s32.totalorder %s24, 0
      %p117 = por %p115, %p116
      %s118 = ssub.s32 %s25, %s37
      %s119 = ssub.s32 %s26, %s33
      %s120 = sor.u32 %s118, %s119
      %p121 = scmp.eq.s32.totalorder %s120, 0
      %s123 = sadd.s32 %s122, 1
      %s124 = scalar_select %p121, %s122, %s123
      %p127 = pneg %p121
      %p128 = scmp.eq.s32.totalorder %s18, 1
      %p129 = por %p127, %p128
      %p130 = scmp.ne.s32.totalorder %s122, %s125
      %p131 = scmp.eq.s32.totalorder %s18, 0
      %p132 = por %p130, %p131
      %p133 = scmp.ne.s32.totalorder %s122, %s125
      %p134 = scmp.eq.s32.totalorder %s23, 1
      %p135 = por %p133, %p134
      %p136 = scmp.ne.s32.totalorder %s125, %s126
      %p137 = scmp.eq.s32.totalorder %s23, 0
      %p138 = por %p136, %p137
      %p139 = scmp.ne.s32.totalorder %s125, %s126
      %p140 = scmp.eq.s32.totalorder %s24, 1
      %p141 = por %p139, %p140
      %p143 = scmp.ne.s32.totalorder %s126, %s142
      %p144 = scmp.eq.s32.totalorder %s24, 0
      %p145 = por %p143, %p144
      %p146 = scmp.le.s32.totalorder 1, %s18
      %p147 = scmp.lt.s32.totalorder %s18, 3
      %p148 = pnand %p146, %p147
      %p149 = pneg %p148
      // Predicated region
      $region9: #{tpu_custom_call.1} parent=5 // pred_check
        _
      $region10: #{tpu_custom_call.1} parent=5 // pred_check_branch
        %151 = sbr.rel (%p148) target = $region12
      $region11: #{tpu_custom_call.1} parent=5 // pred_region
        %s152 = ssub.s32 %s18, 1
      $region12: #{tpu_custom_call.1} parent=5 // pred_fallthru
        _
      %p153 = scmp.lt.s32.totalorder %s18, 2
      // Predicated region
      $region13: #{tpu_custom_call.1} parent=5 // pred_check
        %p154 = pneg %p153
      $region14: #{tpu_custom_call.1} parent=5 // pred_check_branch
        %156 = sbr.rel (%p154) target = $region16
      $region15: #{tpu_custom_call.1} parent=5 // pred_region
        // Predicated region
        $region17: #{tpu_custom_call.1} parent=15 // pred_check
          %p157 = pneg %p52
        $region18: #{tpu_custom_call.1} parent=15 // pred_check_branch
          %159 = sbr.rel (%p157) target = $region20
        $region19: #{tpu_custom_call.1} parent=15 // pred_region
          %s160 = sand.u32 %s42, 1
          %s161 = scalar_lea.sflag [#allocation3], %s160
          %s162 = sand.u32 %s42, 1
          %s163 = smul.addr %s162, 16
          %s164 = scalar_lea.vmem [#allocation2], %s163
          %s165 = smul.u32 2, %s26
          %167 = vsyncadd %s161, 0
          %s168 = smul.addr %s25, 2
          %s169 = sadd.s32 %s165, %s168
          %s170 = smul.addr %s169, 8
          %s171 = scalar_lea.hbm %s0, %s170
          %s172 = sshll.u32 %s171, 4
          %s173 = int_to_ptr.hbm [resolvable:$true] %s172
          %s174 = sshll.u32 %s164, 4
          %s175 = int_to_ptr.vmem [resolvable:$true] %s174
          %180 = dma.hbm_to_vmem [thread:$0]  %s173, 256, %s175, %s161, 128, 128, 8
        $region20: #{tpu_custom_call.1} parent=15 // pred_fallthru
          _
        // Predicated region
        $region21: #{tpu_custom_call.1} parent=15 // pred_check
          %p181 = pneg %p78
        $region22: #{tpu_custom_call.1} parent=15 // pred_check_branch
          %183 = sbr.rel (%p181) target = $region24
        $region23: #{tpu_custom_call.1} parent=15 // pred_region
          %s184 = sand.u32 %s18, 1
          %s185 = scalar_lea.sflag [#allocation6], %s184
          %s186 = sand.u32 %s68, 1
          %s187 = smul.addr %s186, 128
          %s188 = scalar_lea.vmem [#allocation5], %s187
          %190 = vsyncadd %s185, 0
          %s191 = smul.addr %s25, 16
          %s192 = smul.addr %s191, 8
          %s193 = scalar_lea.hbm %s1, %s192
          %s194 = sshll.u32 %s193, 4
          %s195 = int_to_ptr.hbm [resolvable:$true] %s194
          %s196 = sshll.u32 %s188, 4
          %s197 = int_to_ptr.vmem [resolvable:$true] %s196
          %202 = dma.hbm_to_vmem [thread:$0]  %s195, 2048, %s197, %s185, 128, 128, 8
        $region24: #{tpu_custom_call.1} parent=15 // pred_fallthru
          _
        // Predicated region
        $region25: #{tpu_custom_call.1} parent=15 // pred_check
          %p203 = pneg %p104
        $region26: #{tpu_custom_call.1} parent=15 // pred_check_branch
          %205 = sbr.rel (%p203) target = $region28
        $region27: #{tpu_custom_call.1} parent=15 // pred_region
          %s206 = sand.u32 %s18, 1
          %s207 = scalar_lea.sflag [#allocation6], %s206
          %s208 = sand.u32 %s94, 1
          %s209 = scalar_lea.vmem [#allocation7], %s208
          %211 = vsyncadd %s207, 0
          %s212 = scalar_lea.hbm %s2, %s25
          %s214 = sshll.u32 %s212, 4
          %s215 = int_to_ptr.hbm [resolvable:$true] %s214
          %s216 = sshll.u32 %s209, 4
          %s217 = int_to_ptr.vmem [resolvable:$true] %s216
          %219 = dma.hbm_to_vmem [thread:$0]  %s215, 16, %s217, %s207
        $region28: #{tpu_custom_call.1} parent=15 // pred_fallthru
          _
      $region16: #{tpu_custom_call.1} parent=5 // pred_fallthru
        _
      %p220 = scmp.le.s32.totalorder 1, %s18
      %p221 = scmp.lt.s32.totalorder %s18, 3
      %p222 = pnand %p220, %p221
      %p223 = pneg %p222
      // Predicated region
      $region29: #{tpu_custom_call.1} parent=5 // pred_check
        _
      $region30: #{tpu_custom_call.1} parent=5 // pred_check_branch
        %225 = sbr.rel (%p222) target = $region32
      $region31: #{tpu_custom_call.1} parent=5 // pred_region
        %s226 = ssub.s32 %s18, 1
        %s227 = sand.u32 %s45, 1
        %s228 = scalar_lea.sflag [#allocation3], %s227
        %s229 = sand.u32 %s45, 1
        %s230 = smul.addr %s229, 16
        %s231 = scalar_lea.vmem [#allocation2], %s230
        // Predicated region
        $region33: #{tpu_custom_call.1} parent=31 // pred_check
          %p232 = pneg %p58
        $region34: #{tpu_custom_call.1} parent=31 // pred_check_branch
          %234 = sbr.rel (%p232) target = $region36
        $region35: #{tpu_custom_call.1} parent=31 // pred_region
          %236 = dma.done %s228, 256
        $region36: #{tpu_custom_call.1} parent=31 // pred_fallthru
          _
        %s237 = sand.u32 %s23, 1
        %s238 = scalar_lea.sflag [#allocation6], %s237
        %s239 = sand.u32 %s71, 1
        %s240 = smul.addr %s239, 128
        %s241 = scalar_lea.vmem [#allocation5], %s240
        // Predicated region
        $region37: #{tpu_custom_call.1} parent=31 // pred_check
          %p242 = pneg %p84
        $region38: #{tpu_custom_call.1} parent=31 // pred_check_branch
          %244 = sbr.rel (%p242) target = $region40
        $region39: #{tpu_custom_call.1} parent=31 // pred_region
          %246 = dma.done %s238, 2048
        $region40: #{tpu_custom_call.1} parent=31 // pred_fallthru
          _
        %s247 = sand.u32 %s23, 1
        %s248 = scalar_lea.sflag [#allocation6], %s247
        %s249 = sand.u32 %s97, 1
        %s250 = scalar_lea.vmem [#allocation7], %s249
        // Predicated region
        $region41: #{tpu_custom_call.1} parent=31 // pred_check
          %p251 = pneg %p110
        $region42: #{tpu_custom_call.1} parent=31 // pred_check_branch
          %253 = sbr.rel (%p251) target = $region44
        $region43: #{tpu_custom_call.1} parent=31 // pred_region
          %255 = dma.done %s248, 16
        $region44: #{tpu_custom_call.1} parent=31 // pred_fallthru
          _
        %s256 = sand.u32 %s45, 1
        %s257 = scalar_lea.sflag [#allocation3], %s256
        %s258 = sand.u32 %s45, 1
        %s259 = smul.addr %s258, 16
        %s260 = scalar_lea.vmem [#allocation2], %s259
        %p261 = pneg %p58
        %p262 = pneg %p55
        %s263 = sand.u32 %s23, 1
        %s264 = scalar_lea.sflag [#allocation6], %s263
        %s265 = sand.u32 %s71, 1
        %s266 = smul.addr %s265, 128
        %s267 = scalar_lea.vmem [#allocation5], %s266
        %p268 = pneg %p84
        %p269 = pneg %p81
        %s270 = sand.u32 %s23, 1
        %s271 = scalar_lea.sflag [#allocation6], %s270
        %s272 = sand.u32 %s97, 1
        %s273 = scalar_lea.vmem [#allocation7], %s272
        %p274 = pneg %p110
        %p275 = pneg %p107
        %p276 = pneg %p138
        %p277 = pneg %p135
        %s278 = sand.u32 %s125, 1
        %s279 = scalar_lea.sflag [#allocation4], %s278
        %s280 = sand.u32 %s125, 1
        %s281 = smul.addr %s280, 16
        %s282 = scalar_lea.vmem [#allocation8], %s281
        %s283 = smul.u32 2, %s28
        %s284 = smul.u32 2, %s28
        %v285 = vld [vmem:[%s231] sm:$0xff]
        %v286 = vld [vmem:[%s231 + $0x8] sm:$0xff]
        %v287 = vld [vmem:[%s241] sm:$0xff]
        %v288 = vld [vmem:[%s241 + $0x8] sm:$0xff]
        %v289 = vld [vmem:[%s241 + $0x10] sm:$0xff]
        %v290 = vld [vmem:[%s241 + $0x18] sm:$0xff]
        %v291 = vld [vmem:[%s241 + $0x20] sm:$0xff]
        %v292 = vld [vmem:[%s241 + $0x28] sm:$0xff]
        %v293 = vld [vmem:[%s241 + $0x30] sm:$0xff]
        %v294 = vld [vmem:[%s241 + $0x38] sm:$0xff]
        %v295 = vld [vmem:[%s241 + $0x40] sm:$0xff]
        %v296 = vld [vmem:[%s241 + $0x48] sm:$0xff]
        %v297 = vld [vmem:[%s241 + $0x50] sm:$0xff]
        %v298 = vld [vmem:[%s241 + $0x58] sm:$0xff]
        %v299 = vld [vmem:[%s241 + $0x60] sm:$0xff]
        %v300 = vld [vmem:[%s241 + $0x68] sm:$0xff]
        %v301 = vld [vmem:[%s241 + $0x70] sm:$0xff]
        %v302 = vld [vmem:[%s241 + $0x78] sm:$0xff]
        %v303 = vld [vmem:[%s250] sm:$0x1]
        %v305 = vperm.slane %v303, 0
        %307 = vmatpush.msra.mxu0 %v302
        %308 = vmatpush.msra.mxu0 %v301
        %309 = vmatpush.msra.mxu0 %v300
        %310 = vmatpush.msra.mxu0 %v299
        %311 = vmatpush.msra.mxu0 %v298
        %312 = vmatpush.msra.mxu0 %v297
        %313 = vmatpush.msra.mxu0 %v296
        %314 = vmatpush.msra.mxu0 %v295
        %315 = vmatpush.msra.mxu0 %v294
        %316 = vmatpush.msra.mxu0 %v293
        %317 = vmatpush.msra.mxu0 %v292
        %318 = vmatpush.msra.mxu0 %v291
        %319 = vmatpush.msra.mxu0 %v290
        %320 = vmatpush.msra.mxu0 %v289
        %321 = vmatpush.msra.mxu0 %v288
        %322 = vmatpush.msra.mxu0 %v287
        %323 = vmatmul.f32.gmra.mxu0 %v285
        %v324 = vpop.f32.mrf.mxu0
        %v325 = vadd.f32 %v305, %v324
        %326 = vmatmul.f32.gmra.mxu0 %v286
        %v327 = vpop.f32.mrf.mxu0
        %v328 = vadd.f32 %v305, %v327
        %329 = vdwg.mxu0
        %330 = vst [vmem:[%s282] sm:$0xff] %v325
        %331 = vst [vmem:[%s282 + $0x8] sm:$0xff] %v328
        %s332 = sand.u32 %s125, 1
        %s333 = scalar_lea.sflag [#allocation4], %s332
        %s334 = sand.u32 %s125, 1
        %s335 = smul.addr %s334, 16
        %s336 = scalar_lea.vmem [#allocation8], %s335
        // Predicated region
        $region45: #{tpu_custom_call.1} parent=31 // pred_check
          %p337 = pneg %p135
        $region46: #{tpu_custom_call.1} parent=31 // pred_check_branch
          %339 = sbr.rel (%p337) target = $region48
        $region47: #{tpu_custom_call.1} parent=31 // pred_region
          %s340 = smul.u32 2, %s28
          %342 = vsyncadd %s333, 0
          %s343 = smul.addr %s27, 2
          %s344 = sadd.s32 %s340, %s343
          %s345 = smul.addr %s344, 8
          %s346 = scalar_lea.hbm %s3, %s345
          %s347 = sshll.u32 %s336, 4
          %s348 = int_to_ptr.vmem [resolvable:$true] %s347
          %s349 = sshll.u32 %s346, 4
          %s350 = int_to_ptr.hbm [resolvable:$true] %s349
          %355 = dma.vmem_to_hbm [thread:$0]  %s348, 256, %s350, %s333, 128, 128, 8
        $region48: #{tpu_custom_call.1} parent=31 // pred_fallthru
          _
      $region32: #{tpu_custom_call.1} parent=5 // pred_fallthru
        _
      %p356 = scmp.le.s32.totalorder 2, %s18
      // Predicated region
      $region49: #{tpu_custom_call.1} parent=5 // pred_check
        %p357 = pneg %p356
      $region50: #{tpu_custom_call.1} parent=5 // pred_check_branch
        %359 = sbr.rel (%p357) target = $region52
      $region51: #{tpu_custom_call.1} parent=5 // pred_region
        %s360 = ssub.s32 %s18, 2
        // Predicated region
        $region53: #{tpu_custom_call.1} parent=51 // pred_check
          %p361 = pneg %p141
        $region54: #{tpu_custom_call.1} parent=51 // pred_check_branch
          %363 = sbr.rel (%p361) target = $region56
        $region55: #{tpu_custom_call.1} parent=51 // pred_region
          %s364 = sand.u32 %s126, 1
          %s365 = scalar_lea.sflag [#allocation4], %s364
          %s366 = sand.u32 %s126, 1
          %s367 = smul.addr %s366, 16
          %s368 = scalar_lea.vmem [#allocation8], %s367
          %370 = dma.done %s365, 256
        $region56: #{tpu_custom_call.1} parent=51 // pred_fallthru
          _
      $region52: #{tpu_custom_call.1} parent=5 // pred_fallthru
        _
    $region6: #{tpu_custom_call.1} parent=1 // loop_footer
      %s22 = sadd.s32 1, %s18
    $region7: #{tpu_custom_call.1} parent=1 // loop_footer_branch
      %17 = sbr.rel target = $region3
    $region8: #{tpu_custom_call.1} parent=1 // loop_exit
      _
    %371 = vsyncpa [#allocation3], 1
    %s372 = scalar_lea.sflag [#allocation3], 1
    %373 = vsyncpa %s372, 1
    %374 = vsyncpa [#allocation6], 1
    %s375 = scalar_lea.sflag [#allocation6], 1
    %376 = vsyncpa %s375, 1
    %377 = vsyncpa [#allocation4], 1
    %s378 = scalar_lea.sflag [#allocation4], 1
    %379 = vsyncpa %s378, 1

</llo_original>
